<compile_context>
chip_gen: v5e
topology: v5e:2x2
jax: 0.10.0
libtpu: 0.0.40
codegen_flags: <defaults>
</compile_context>

<pallas_src>
import jax
import jax.numpy as jnp
from jax import lax
from jax.experimental import pallas as pl
from jax.experimental.pallas import tpu as pltpu

EPS = 1e-12  # torch.nn.functional.normalize default eps


def _l2_normalize_kernel(x_ref, o_ref):
    # x_ref / o_ref: (nb, C, tile_s) block in VMEM; normalize over axis=1 (C).
    x = x_ref[...]
    xf = x.astype(jnp.float32)
    sumsq = jnp.sum(xf * xf, axis=1, keepdims=True)           # (nb, 1, tile_s)
    # rsqrt(max(sumsq, eps^2)) == 1 / max(norm, eps): one EUP op per column.
    inv = lax.rsqrt(jnp.maximum(sumsq, EPS * EPS))
    if o_ref.dtype == jnp.bfloat16:
        # bf16 VALU path (v6e/v7x): avoid keeping the full f32 copy of x live
        # for the multiply.  inv fits bf16 range (<= 1e12).
        o_ref[...] = x * inv.astype(jnp.bfloat16)
    else:
        o_ref[...] = (xf * inv).astype(o_ref.dtype)


def _round_up(v, m):
    return -(-v // m) * m


def _choose_tiles(B, C, S, itemsize, max_block_bytes, target_steps=8):
    """Pick (nb, tile_s): nb batch rows and tile_s spatial lanes per block."""
    eff = max(itemsize, 4)  # f32 temporaries dominate VMEM for sub-32-bit inputs

    # Pack multiple batch rows per block when C is tiny (amortize step overhead).
    nb = 1
    if C < 8:
        for d in range(min(B, max(1, 8 // C)), 0, -1):
            if B % d == 0:
                nb = d
                break
    # Back the packing off if it would starve the grid: we want >= target_steps
    # pipeline steps so DMA/compute overlap and megacore sharding has work.
    ns_max = pl.cdiv(S, 128)
    while nb > 1 and ns_max * (B // nb) < target_steps:
        nb -= 1
        while nb > 1 and B % nb != 0:
            nb -= 1
    nbb = B // nb

    # Spatial tile from the VMEM byte budget (multiple of 128 lanes)...
    bytes_per_col = nb * C * eff
    budget_tile = max(128, (max_block_bytes // bytes_per_col) // 128 * 128)
    # ...capped so the grid keeps at least ~target_steps steps when possible.
    needed_ns = pl.cdiv(target_steps, nbb)
    grid_cap = max(128, (pl.cdiv(S, needed_ns) // 128) * 128)
    tile_s = max(128, min(budget_tile, grid_cap, _round_up(S, 128)))
    return nb, tile_s


def contrastive_forward(features, *, max_block_bytes=6 << 20):
    """L2-normalize `features` (NCHW) along dim=1 with a Pallas TPU kernel."""
    B, C, H, W = features.shape
    S = H * W
    x = features.reshape(B, C, S)
    itemsize = jnp.dtype(features.dtype).itemsize

    nb, tile_s = _choose_tiles(B, C, S, itemsize, max_block_bytes)
    ns = pl.cdiv(S, tile_s)   # partial last block handled by the pipeline (no pad/slice)
    nbb = B // nb

    # Put the longer grid axis first so megacore sharding stays balanced.
    if ns >= nbb:
        grid = (ns, nbb)
        imap = lambda s, b: (b, 0, s)
    else:
        grid = (nbb, ns)
        imap = lambda b, s: (b, 0, s)

    block = (nb, C, tile_s)
    block_bytes = nb * C * tile_s * itemsize
    # in + out double-buffered, plus the f32 temporaries inside the body.
    # TODO(synk): for huge C (block exceeds budget even at 128 lanes), split C
    # across an extra "arbitrary" grid axis with a sumsq accumulator in scratch.
    needed_vmem = 4 * block_bytes + 2 * nb * C * tile_s * 4 + (1 << 20)
    vmem_limit = int(min(max(32 << 20, needed_vmem), 48 << 20))

    cost = pl.CostEstimate(
        flops=3 * B * C * S,
        transcendentals=B * S,
        bytes_accessed=2 * B * C * S * itemsize,
    )

    out = pl.pallas_call(
        _l2_normalize_kernel,
        out_shape=jax.ShapeDtypeStruct((B, C, S), features.dtype),
        grid_spec=pltpu.PrefetchScalarGridSpec(
            num_scalar_prefetch=0,
            grid=grid,
            in_specs=[pl.BlockSpec(block, imap)],
            out_specs=pl.BlockSpec(block, imap),
        ),
        compiler_params=pltpu.CompilerParams(
            dimension_semantics=("parallel", "parallel"),
            vmem_limit_bytes=vmem_limit,
        ),
        cost_estimate=cost,
    )(x)
    return out.reshape(B, C, H, W)


def _reference(features):
    x = features.astype(jnp.float32)
    norm = jnp.sqrt(jnp.sum(x * x, axis=1, keepdims=True))
    return (x / jnp.maximum(norm, EPS)).astype(features.dtype)


if __name__ == "__main__":
    key = jax.random.PRNGKey(0)

    # Evenly tiled case.
    x = jax.random.normal(key, (2, 4, 16, 16), dtype=jnp.float32)
    out = jax.block_until_ready(contrastive_forward(x))
    assert out.shape == x.shape
    assert jnp.allclose(out, _reference(x), atol=1e-5, rtol=1e-5)

    # Ragged spatial extent (S = 100, not a multiple of 128): partial last
    # block handled by the pipeline, no jnp.pad / output slice.
    x2 = jax.random.normal(jax.random.PRNGKey(0), (2, 4, 10, 10), dtype=jnp.float32)
    out2 = jax.block_until_ready(contrastive_forward(x2))
    assert out2.shape == x2.shape
    assert jnp.allclose(out2, _reference(x2), atol=1e-5, rtol=1e-5)

    print("KERNEL_OK")
</pallas_src>

<mosaic_0001>
module attributes {stable_mosaic.version = 11 : i64} {
  func.func @_l2_normalize_kernel(%arg0: i32, %arg1: i32, %arg2: memref<1x4x128xf32, #tpu.memory_space<vmem>>, %arg3: memref<1x4x128xf32, #tpu.memory_space<vmem>>) attributes {dimension_semantics = [#tpu.dimension_semantics<parallel>, #tpu.dimension_semantics<parallel>], iteration_bounds = array<i64: 2, 2>, scalar_prefetch = 0 : i64, scratch_operands = 0 : i64, tpu.core_type = #tpu.core_type<tc>, window_params = [{transform_indices = @transform_0, window_bounds = array<i64: 1, 4, 128>}, {transform_indices = @transform_1, window_bounds = array<i64: 1, 4, 128>}]} {
    %c0 = arith.constant 0 : index
    %c0_0 = arith.constant 0 : index
    %c0_1 = arith.constant 0 : index
    %0 = vector.load %arg2[%c0, %c0_0, %c0_1] : memref<1x4x128xf32, #tpu.memory_space<vmem>>, vector<1x4x128xf32>
    %1 = arith.mulf %0, %0 : vector<1x4x128xf32>
    %cst = arith.constant dense<0.000000e+00> : vector<1x128xf32>
    %2 = vector.multi_reduction <add>, %1, %cst [1] : vector<1x4x128xf32> to vector<1x128xf32>
    %3 = vector.shape_cast %2 : vector<1x128xf32> to vector<1x1x128xf32>
    %cst_2 = arith.constant 1.000000e-24 : f32
    %4 = vector.broadcast %cst_2 : f32 to vector<1x1x128xf32>
    %5 = arith.maximumf %3, %4 : vector<1x1x128xf32>
    %6 = math.rsqrt %5 : vector<1x1x128xf32>
    %7 = vector.broadcast %6 : vector<1x1x128xf32> to vector<1x4x128xf32>
    %8 = arith.mulf %0, %7 : vector<1x4x128xf32>
    %c0_3 = arith.constant 0 : index
    %c0_4 = arith.constant 0 : index
    %c0_5 = arith.constant 0 : index
    %9 = vector.load %arg3[%c0_3, %c0_4, %c0_5] : memref<1x4x128xf32, #tpu.memory_space<vmem>>, vector<1x4x128xf32>
    tpu.vector_store %arg3[%c0_3, %c0_4, %c0_5], %8 {strides = array<i32>} : memref<1x4x128xf32, #tpu.memory_space<vmem>>, vector<1x4x128xf32>,
    return
  }
  func.func @transform_0(%arg0: i32, %arg1: i32) -> (i32, i32, i32) {
    %c0_i32 = arith.constant 0 : i32
    %c0_i32_0 = arith.constant 0 : i32
    return %arg1, %c0_i32, %arg0 : i32, i32, i32
  }
  func.func @transform_1(%arg0: i32, %arg1: i32) -> (i32, i32, i32) {
    %c0_i32 = arith.constant 0 : i32
    %c0_i32_0 = arith.constant 0 : i32
    return %arg1, %c0_i32, %arg0 : i32, i32, i32
  }
}

</mosaic_0001>

<llo_original>
// kernel: tpu_custom_call.1
$region0: #{tpu_custom_call.1}
  #allocation0 [shape = 'u32[]', space=smem, size = 0x4, offset = 0x4, fixed_abs, tag = 'smem constant byte address 0x4 - core index']
  #allocation1 [shape = 'u32[72,128]{1,0:T(1,128)}', space=vmem, size = 0x9000, scoped, tag = 'internal scratch']
  %s0 = inlined_call_operand.hbm [shape: f32[2,4,256], index: 0, kind: input, shape index: {}]
  %s1 = inlined_call_operand.hbm [shape: f32[2,4,256], index: 1, kind: output, shape index: {}]
  %s2 = sld [smem:[#allocation0]]
  $region41: #{tpu_custom_call.1} parent=0
    _
  %s4 = ssub.s32 1, %s2
  %s5 = scalar_select 0, %s4, %s2
  $region1: #{tpu_custom_call.1} parent=0
    #allocation2 [shape = 'u8[4096]{0}', space=vmem, size = 0x1000, scoped, tag = 'input window, operand 0']
    #allocation3 [shape = 's32[2]{0}', space=sflag, size = 0x8, scoped, tag = 'scoped memory for tpu_custom_call.1']
    #allocation4 [shape = 's32[2]{0}', space=sflag, size = 0x8, scoped, tag = 'scoped memory for tpu_custom_call.1']
    #allocation5 [shape = 'u8[4096]{0}', space=vmem, size = 0x1000, scoped, tag = 'output window, operand 0']
    %6 = vsyncpa [#allocation3], 0
    %s7 = scalar_lea.sflag [#allocation3], 1
    %8 = vsyncpa %s7, 0
    %9 = vsyncpa [#allocation4], 0
    %s10 = scalar_lea.sflag [#allocation4], 1
    %11 = vsyncpa %s10, 0
    loop: start=0, step=1, limit=6
    $region2: #{tpu_custom_call.1} parent=1 // loop_pre_header
      _
    $region3: #{tpu_custom_call.1} parent=1 // loop_header
      %s13 = sphi 0, %s17
      %p14 = scmp.ge.s32.totalorder %s13, 6
      %s20 = sphi 0, %s32
      %s21 = sphi 0, %s28
      %s22 = sphi 0, %s20
      %s23 = sphi 0, %s21
      %s24 = sphi 0, %s22
      %s25 = sphi 0, %s23
      %s37 = sphi 0, %s39
      %s40 = sphi 0, %s37
      %s41 = sphi 0, %s40
      %s57 = sphi 0, %s41
      %s65 = sphi 0, %s67
      %s68 = sphi 0, %s65
      %s69 = sphi 0, %s68
      %s85 = sphi 0, %s69
    $region4: #{tpu_custom_call.1} parent=1 // loop_header_branch
      %16 = sbr.rel (%p14) target = $region8
    $region5: #{tpu_custom_call.1} parent=1 // loop_body
      %s18 = ssub.s32 %s13, 1
      %s19 = ssub.s32 %s13, 2
      %s26 = sadd.s32 1, %s21
      %p27 = scmp.ge.s32.totalorder %s26, 2
      %s28 = scalar_select %p27, 0, %s26
      %s29 = sadd.s32 1, %s20
      %s30 = scalar_select %p27, %s29, %s20
      %p31 = scmp.ge.s32.totalorder %s30, 2
      %s32 = scalar_select %p31, 0, %s30
      %s33 = ssub.s32 %s21, %s28
      %s34 = ssub.s32 %s20, %s32
      %s35 = sor.u32 %s33, %s34
      %p36 = scmp.eq.s32.totalorder %s35, 0
      %s38 = sadd.s32 %s37, 1
      %s39 = scalar_select %p36, %s37, %s38
      %p42 = pneg %p36
      %p43 = scmp.eq.s32.totalorder %s13, 3
      %p44 = por %p42, %p43
      %p45 = scmp.ne.s32.totalorder %s37, %s40
      %p46 = scmp.eq.s32.totalorder %s13, 0
      %p47 = por %p45, %p46
      %p48 = scmp.ne.s32.totalorder %s37, %s40
      %p49 = scmp.eq.s32.totalorder %s18, 3
      %p50 = por %p48, %p49
      %p51 = scmp.ne.s32.totalorder %s40, %s41
      %p52 = scmp.eq.s32.totalorder %s18, 0
      %p53 = por %p51, %p52
      %p54 = scmp.ne.s32.totalorder %s40, %s41
      %p55 = scmp.eq.s32.totalorder %s19, 3
      %p56 = por %p54, %p55
      %p58 = scmp.ne.s32.totalorder %s41, %s57
      %p59 = scmp.eq.s32.totalorder %s19, 0
      %p60 = por %p58, %p59
      %s61 = ssub.s32 %s21, %s28
      %s62 = ssub.s32 %s20, %s32
      %s63 = sor.u32 %s61, %s62
      %p64 = scmp.eq.s32.totalorder %s63, 0
      %s66 = sadd.s32 %s65, 1
      %s67 = scalar_select %p64, %s65, %s66
      %p70 = pneg %p64
      %p71 = scmp.eq.s32.totalorder %s13, 3
      %p72 = por %p70, %p71
      %p73 = scmp.ne.s32.totalorder %s65, %s68
      %p74 = scmp.eq.s32.totalorder %s13, 0
      %p75 = por %p73, %p74
      %p76 = scmp.ne.s32.totalorder %s65, %s68
      %p77 = scmp.eq.s32.totalorder %s18, 3
      %p78 = por %p76, %p77
      %p79 = scmp.ne.s32.totalorder %s68, %s69
      %p80 = scmp.eq.s32.totalorder %s18, 0
      %p81 = por %p79, %p80
      %p82 = scmp.ne.s32.totalorder %s68, %s69
      %p83 = scmp.eq.s32.totalorder %s19, 3
      %p84 = por %p82, %p83
      %p86 = scmp.ne.s32.totalorder %s69, %s85
      %p87 = scmp.eq.s32.totalorder %s19, 0
      %p88 = por %p86, %p87
      %p89 = scmp.le.s32.totalorder 1, %s13
      %p90 = scmp.lt.s32.totalorder %s13, 5
      %p91 = pnand %p89, %p90
      %p92 = pneg %p91
      // Predicated region
      $region9: #{tpu_custom_call.1} parent=5 // pred_check
        _
      $region10: #{tpu_custom_call.1} parent=5 // pred_check_branch
        %94 = sbr.rel (%p91) target = $region12
      $region11: #{tpu_custom_call.1} parent=5 // pred_region
        %s95 = ssub.s32 %s13, 1
      $region12: #{tpu_custom_call.1} parent=5 // pred_fallthru
        _
      %p96 = scmp.lt.s32.totalorder %s13, 4
      // Predicated region
      $region13: #{tpu_custom_call.1} parent=5 // pred_check
        %p97 = pneg %p96
      $region14: #{tpu_custom_call.1} parent=5 // pred_check_branch
        %99 = sbr.rel (%p97) target = $region16
      $region15: #{tpu_custom_call.1} parent=5 // pred_region
        // Predicated region
        $region17: #{tpu_custom_call.1} parent=15 // pred_check
          %p100 = pneg %p47
        $region18: #{tpu_custom_call.1} parent=15 // pred_check_branch
          %102 = sbr.rel (%p100) target = $region20
        $region19: #{tpu_custom_call.1} parent=15 // pred_region
          %s103 = sand.u32 %s37, 1
          %s104 = scalar_lea.sflag [#allocation3], %s103
          %s105 = sand.u32 %s37, 1
          %s106 = smul.addr %s105, 4
          %s107 = scalar_lea.vmem [#allocation2], %s106
          %109 = vsyncadd %s104, 0
          %s110 = smul.addr %s21, 2
          %s111 = sadd.s32 %s20, %s110
          %s112 = smul.addr %s111, 4
          %s113 = scalar_lea.hbm %s0, %s112
          %s115 = sshll.u32 %s113, 4
          %s116 = int_to_ptr.hbm [resolvable:$true] %s115
          %s117 = sshll.u32 %s107, 4
          %s118 = int_to_ptr.vmem [resolvable:$true] %s117
          %120 = dma.hbm_to_vmem [thread:$0]  %s116, 64, %s118, %s104
        $region20: #{tpu_custom_call.1} parent=15 // pred_fallthru
          _
      $region16: #{tpu_custom_call.1} parent=5 // pred_fallthru
        _
      %p121 = scmp.le.s32.totalorder 1, %s13
      %p122 = scmp.lt.s32.totalorder %s13, 5
      %p123 = pnand %p121, %p122
      %p124 = pneg %p123
      // Predicated region
      $region21: #{tpu_custom_call.1} parent=5 // pred_check
        _
      $region22: #{tpu_custom_call.1} parent=5 // pred_check_branch
        %126 = sbr.rel (%p123) target = $region24
      $region23: #{tpu_custom_call.1} parent=5 // pred_region
        %s127 = ssub.s32 %s13, 1
        %s128 = sand.u32 %s40, 1
        %s129 = scalar_lea.sflag [#allocation3], %s128
        %s130 = sand.u32 %s40, 1
        %s131 = smul.addr %s130, 4
        %s132 = scalar_lea.vmem [#allocation2], %s131
        // Predicated region
        $region25: #{tpu_custom_call.1} parent=23 // pred_check
          %p133 = pneg %p53
        $region26: #{tpu_custom_call.1} parent=23 // pred_check_branch
          %135 = sbr.rel (%p133) target = $region28
        $region27: #{tpu_custom_call.1} parent=23 // pred_region
          %137 = dma.done %s129, 64
        $region28: #{tpu_custom_call.1} parent=23 // pred_fallthru
          _
        %s138 = sand.u32 %s40, 1
        %s139 = scalar_lea.sflag [#allocation3], %s138
        %s140 = sand.u32 %s40, 1
        %s141 = smul.addr %s140, 4
        %s142 = scalar_lea.vmem [#allocation2], %s141
        %p143 = pneg %p53
        %p144 = pneg %p50
        %p145 = pneg %p81
        %p146 = pneg %p78
        %s147 = sand.u32 %s68, 1
        %s148 = scalar_lea.sflag [#allocation4], %s147
        %s149 = sand.u32 %s68, 1
        %s150 = smul.addr %s149, 4
        %s151 = scalar_lea.vmem [#allocation5], %s150
        %v152 = vld [vmem:[%s132] sm:$0xf]
        %v153 = vmul.f32 %v152, %v152
        %vm154 = vcmask 1043456
        %v155 = vsel %vm154, %v153, 0.0
        %v156 = vrot.slane %v155, 4
        %v157 = vadd.f32 %v155, %v156
        %v158 = vrot.slane %v157, 2
        %v159 = vadd.f32 %v157, %v158
        %v160 = vrot.slane %v159, 1
        %v161 = vadd.f32 %v159, %v160
        %v162 = vmax.f32 %v161, 1e-24
        %v163 = vrsqrt.pop %v162
        %v164 = vmul.f32 %v163, %v162
        %v165 = vmul.f32 %v164, %v163
        %v166 = vmul.f32 0.5, %v165
        %v167 = vsub.f32 1.5, %v166
        %v168 = vmul.f32 %v163, %v167
        %vm169 = vweird.f32 %v162
        %vm170 = vweird.f32 %v163
        %vm171 = vmor %vm169, %vm170
        %v172 = vsel %vm171, %v163, %v168
        %v173 = vmul.f32 %v152, %v172
        %174 = vst [vmem:[%s151] sm:$0xf] %v173
        %s175 = sand.u32 %s68, 1
        %s176 = scalar_lea.sflag [#allocation4], %s175
        %s177 = sand.u32 %s68, 1
        %s178 = smul.addr %s177, 4
        %s179 = scalar_lea.vmem [#allocation5], %s178
        // Predicated region
        $region29: #{tpu_custom_call.1} parent=23 // pred_check
          %p180 = pneg %p78
        $region30: #{tpu_custom_call.1} parent=23 // pred_check_branch
          %182 = sbr.rel (%p180) target = $region32
        $region31: #{tpu_custom_call.1} parent=23 // pred_region
          %184 = vsyncadd %s176, 0
          %s185 = smul.addr %s23, 2
          %s186 = sadd.s32 %s22, %s185
          %s187 = smul.addr %s186, 4
          %s188 = scalar_lea.hbm %s1, %s187
          %s190 = sshll.u32 %s179, 4
          %s191 = int_to_ptr.vmem [resolvable:$true] %s190
          %s192 = sshll.u32 %s188, 4
          %s193 = int_to_ptr.hbm [resolvable:$true] %s192
          %195 = dma.vmem_to_hbm [thread:$0]  %s191, 64, %s193, %s176
        $region32: #{tpu_custom_call.1} parent=23 // pred_fallthru
          _
      $region24: #{tpu_custom_call.1} parent=5 // pred_fallthru
        _
      %p196 = scmp.le.s32.totalorder 2, %s13
      // Predicated region
      $region33: #{tpu_custom_call.1} parent=5 // pred_check
        %p197 = pneg %p196
      $region34: #{tpu_custom_call.1} parent=5 // pred_check_branch
        %199 = sbr.rel (%p197) target = $region36
      $region35: #{tpu_custom_call.1} parent=5 // pred_region
        %s200 = ssub.s32 %s13, 2
        // Predicated region
        $region37: #{tpu_custom_call.1} parent=35 // pred_check
          %p201 = pneg %p84
        $region38: #{tpu_custom_call.1} parent=35 // pred_check_branch
          %203 = sbr.rel (%p201) target = $region40
        $region39: #{tpu_custom_call.1} parent=35 // pred_region
          %s204 = sand.u32 %s69, 1
          %s205 = scalar_lea.sflag [#allocation4], %s204
          %s206 = sand.u32 %s69, 1
          %s207 = smul.addr %s206, 4
          %s208 = scalar_lea.vmem [#allocation5], %s207
          %210 = dma.done %s205, 64
        $region40: #{tpu_custom_call.1} parent=35 // pred_fallthru
          _
      $region36: #{tpu_custom_call.1} parent=5 // pred_fallthru
        _
    $region6: #{tpu_custom_call.1} parent=1 // loop_footer
      %s17 = sadd.s32 1, %s13
    $region7: #{tpu_custom_call.1} parent=1 // loop_footer_branch
      %12 = sbr.rel target = $region3
    $region8: #{tpu_custom_call.1} parent=1 // loop_exit
      _
    %211 = vsyncpa [#allocation3], 1
    %s212 = scalar_lea.sflag [#allocation3], 1
    %213 = vsyncpa %s212, 1
    %214 = vsyncpa [#allocation4], 1
    %s215 = scalar_lea.sflag [#allocation4], 1
    %216 = vsyncpa %s215, 1

</llo_original>
